<compile_context>
chip_gen: v5e
topology: v5e:2x2
jax: 0.10.0
libtpu: 0.0.40
codegen_flags: <defaults>
</compile_context>

<pallas_src>
import jax
import jax.numpy as jnp
from jax.experimental import pallas as pl
from jax.experimental.pallas import tpu as pltpu

SUBLANE = 8  # f32 sublane width (second-to-last dim granularity)


def _round_up(n, m):
    return (n + m - 1) // m * m


def simple_nn_kernel(x_ref, w1_ref, b1_ref, w2_ref, b2_ref, o_ref):
    # fc1: [tm, in_f] @ [in_f, hid] + [1, hid]   (f32 accumulate on MXU)
    h = jnp.dot(x_ref[...], w1_ref[...], preferred_element_type=jnp.float32)
    h = jnp.maximum(h + b1_ref[...], 0.0)          # ReLU, keep f32 accumulator
    # fc2: [tm, hid] @ [hid, n_cls] + [1, n_cls]
    out = jnp.dot(h, w2_ref[...], preferred_element_type=jnp.float32)
    o_ref[...] = (out + b2_ref[...]).astype(o_ref.dtype)


def simple_nn_forward(x, w1, b1, w2, b2, *, tile_m=2048, small_batch=256):
    """x: [B, input_size]; w1: [input_size, hidden]; b1: [hidden] or [1, hidden];
    w2: [hidden, num_classes]; b2: [num_classes] or [1, num_classes]."""
    B, in_f = x.shape
    hidden = w1.shape[1]
    n_cls = w2.shape[1]

    # Biases as (1, F) rows so the in-kernel add broadcasts along the batch.
    b1 = jnp.reshape(b1, (1, hidden))
    b2 = jnp.reshape(b2, (1, n_cls))

    # Advisory cost from the *logical* (unpadded) shapes.
    itemsize = x.dtype.itemsize
    flops = 2 * B * (in_f * hidden + hidden * n_cls)
    bytes_accessed = itemsize * (B * in_f + in_f * hidden + hidden
                                 + hidden * n_cls + n_cls + B * n_cls)
    cost = pl.CostEstimate(flops=int(flops), transcendentals=0,
                           bytes_accessed=int(bytes_accessed))

    out_shape = jax.ShapeDtypeStruct((B, n_cls), x.dtype)

    if B <= small_batch:
        # Tiny batch: no grid, no pipeline scaffolding — every operand is a
        # single whole-array VMEM block (block == full array, so the (8,128)
        # divisibility rule does not apply).
        return pl.pallas_call(
            simple_nn_kernel,
            out_shape=out_shape,
            in_specs=[pl.BlockSpec(memory_space=pltpu.MemorySpace.VMEM)] * 5,
            out_specs=pl.BlockSpec(memory_space=pltpu.MemorySpace.VMEM),
            cost_estimate=cost,
        )(x, w1, b1, w2, b2)

    # Larger batch: tile only the batch axis.  Pick the tile so there are at
    # least 2 grid steps (lets "parallel" semantics use both v7x TensorCores),
    # but never bigger than tile_m.  x / out keep their full (unpadded) last
    # dim, so blocks are legal and DMA-contiguous without any padding.
    tm = min(tile_m, _round_up(pl.cdiv(B, 2), SUBLANE))
    grid = (pl.cdiv(B, tm),)   # partial last tile is masked by Pallas

    return pl.pallas_call(
        simple_nn_kernel,
        out_shape=out_shape,
        grid_spec=pltpu.PrefetchScalarGridSpec(
            num_scalar_prefetch=0,
            grid=grid,
            in_specs=[
                pl.BlockSpec((tm, in_f), lambda i: (i, 0)),
                pl.BlockSpec((in_f, hidden), lambda i: (0, 0)),   # VMEM-resident
                pl.BlockSpec((1, hidden), lambda i: (0, 0)),
                pl.BlockSpec((hidden, n_cls), lambda i: (0, 0)),
                pl.BlockSpec((1, n_cls), lambda i: (0, 0)),
            ],
            out_specs=pl.BlockSpec((tm, n_cls), lambda i: (i, 0)),
        ),
        compiler_params=pltpu.CompilerParams(
            dimension_semantics=("parallel",),   # megacore sharding on v7x
        ),
        cost_estimate=cost,
    )(x, w1, b1, w2, b2)


if __name__ == "__main__":
    # Small shapes consistent with the module's forward.
    batch = 8
    input_size = 32
    hidden_size = 64
    num_classes = 16

    key = jax.random.PRNGKey(0)
    kx, kw1, kb1, kw2, kb2, kx2 = jax.random.split(key, 6)

    x = jax.random.normal(kx, (batch, input_size), dtype=jnp.float32)

    # Deterministic parameter init (mimics nn.Linear uniform(-1/sqrt(in), 1/sqrt(in))).
    lim1 = 1.0 / jnp.sqrt(jnp.float32(input_size))
    lim2 = 1.0 / jnp.sqrt(jnp.float32(hidden_size))
    w1 = jax.random.uniform(kw1, (input_size, hidden_size),
                            minval=-lim1, maxval=lim1, dtype=jnp.float32)
    b1 = jax.random.uniform(kb1, (1, hidden_size),
                            minval=-lim1, maxval=lim1, dtype=jnp.float32)
    w2 = jax.random.uniform(kw2, (hidden_size, num_classes),
                            minval=-lim2, maxval=lim2, dtype=jnp.float32)
    b2 = jax.random.uniform(kb2, (1, num_classes),
                            minval=-lim2, maxval=lim2, dtype=jnp.float32)

    def ref_fwd(xx):
        return jnp.maximum(xx @ w1 + b1, 0.0) @ w2 + b2

    # 1) Tiny-batch (grid-less, whole-array VMEM) path.
    out = jax.block_until_ready(simple_nn_forward(x, w1, b1, w2, b2))
    assert out.shape == (batch, num_classes)
    assert jnp.allclose(out, ref_fwd(x), atol=1e-5, rtol=1e-5)

    # 2) Batch-tiled grid path (2 grid steps -> exercises megacore sharding).
    x_big = jax.random.normal(kx2, (512, input_size), dtype=jnp.float32)
    out_big = jax.block_until_ready(simple_nn_forward(x_big, w1, b1, w2, b2))
    assert out_big.shape == (512, num_classes)
    assert jnp.allclose(out_big, ref_fwd(x_big), atol=1e-4, rtol=1e-4)

    print("KERNEL_OK")
</pallas_src>

<mosaic_0001>
module attributes {stable_mosaic.version = 11 : i64} {
  func.func @simple_nn_kernel(%arg0: memref<8x32xf32, #tpu.memory_space<vmem>>, %arg1: memref<32x64xf32, #tpu.memory_space<vmem>>, %arg2: memref<1x64xf32, #tpu.memory_space<vmem>>, %arg3: memref<64x16xf32, #tpu.memory_space<vmem>>, %arg4: memref<1x16xf32, #tpu.memory_space<vmem>>, %arg5: memref<8x16xf32, #tpu.memory_space<vmem>>) attributes {dimension_semantics = [], scalar_prefetch = 0 : i64, scratch_operands = 0 : i64, tpu.core_type = #tpu.core_type<tc>} {
    %c0 = arith.constant 0 : index
    %c0_0 = arith.constant 0 : index
    %0 = vector.load %arg0[%c0, %c0_0] : memref<8x32xf32, #tpu.memory_space<vmem>>, vector<8x32xf32>
    %c0_1 = arith.constant 0 : index
    %c0_2 = arith.constant 0 : index
    %1 = vector.load %arg1[%c0_1, %c0_2] : memref<32x64xf32, #tpu.memory_space<vmem>>, vector<32x64xf32>
    %cst = arith.constant dense<0.000000e+00> : vector<8x64xf32>
    %2 = tpu.matmul %0, %1, %cst {dimension_numbers = #tpu.dot_dimension_numbers<[1], [0], [0], [1], [0, 0, 1, 1], [], []>} : vector<8x32xf32>, vector<32x64xf32>, vector<8x64xf32> -> vector<8x64xf32>
    %c0_3 = arith.constant 0 : index
    %c0_4 = arith.constant 0 : index
    %3 = vector.load %arg2[%c0_3, %c0_4] : memref<1x64xf32, #tpu.memory_space<vmem>>, vector<1x64xf32>
    %4 = vector.broadcast %3 : vector<1x64xf32> to vector<8x64xf32>
    %5 = arith.addf %2, %4 : vector<8x64xf32>
    %cst_5 = arith.constant 0.000000e+00 : f32
    %6 = vector.broadcast %cst_5 : f32 to vector<8x64xf32>
    %7 = arith.maximumf %5, %6 : vector<8x64xf32>
    %c0_6 = arith.constant 0 : index
    %c0_7 = arith.constant 0 : index
    %8 = vector.load %arg3[%c0_6, %c0_7] : memref<64x16xf32, #tpu.memory_space<vmem>>, vector<64x16xf32>
    %cst_8 = arith.constant dense<0.000000e+00> : vector<8x16xf32>
    %9 = tpu.matmul %7, %8, %cst_8 {dimension_numbers = #tpu.dot_dimension_numbers<[1], [0], [0], [1], [0, 0, 1, 1], [], []>} : vector<8x64xf32>, vector<64x16xf32>, vector<8x16xf32> -> vector<8x16xf32>
    %c0_9 = arith.constant 0 : index
    %c0_10 = arith.constant 0 : index
    %10 = vector.load %arg4[%c0_9, %c0_10] : memref<1x16xf32, #tpu.memory_space<vmem>>, vector<1x16xf32>
    %11 = vector.broadcast %10 : vector<1x16xf32> to vector<8x16xf32>
    %12 = arith.addf %9, %11 : vector<8x16xf32>
    %c0_11 = arith.constant 0 : index
    %c0_12 = arith.constant 0 : index
    %13 = vector.load %arg5[%c0_11, %c0_12] : memref<8x16xf32, #tpu.memory_space<vmem>>, vector<8x16xf32>
    tpu.vector_store %arg5[%c0_11, %c0_12], %12 {strides = array<i32>} : memref<8x16xf32, #tpu.memory_space<vmem>>, vector<8x16xf32>,
    return
  }
}

</mosaic_0001>

<llo_original>
// kernel: tpu_custom_call.1
$region0: #{tpu_custom_call.1}
  #allocation0 [shape = 'u32[]', space=smem, size = 0x4, offset = 0x4, fixed_abs, tag = 'smem constant byte address 0x4 - core index']
  #allocation1 [shape = 'u32[72,128]{1,0:T(1,128)}', space=vmem, size = 0x9000, scoped, tag = 'internal scratch']
  %s0 = inlined_call_operand.vmem [shape: f32[8,32], index: 0, kind: input, shape index: {}]
  %s1 = inlined_call_operand.vmem [shape: f32[32,64], index: 1, kind: input, shape index: {}]
  %s2 = inlined_call_operand.vmem [shape: f32[1,64], index: 2, kind: input, shape index: {}]
  %s3 = inlined_call_operand.vmem [shape: f32[64,16], index: 3, kind: input, shape index: {}]
  %s4 = inlined_call_operand.vmem [shape: f32[1,16], index: 4, kind: input, shape index: {}]
  %s5 = inlined_call_operand.hbm [shape: f32[8,16], index: 5, kind: output, shape index: {}]
  %s6 = sld [smem:[#allocation0]]
  $region30: #{tpu_custom_call.1} parent=0
    _
  %s8 = ssub.s32 1, %s6
  %s9 = scalar_select 0, %s8, %s6
  $region1: #{tpu_custom_call.1} parent=0
    #allocation2 [shape = 'u8[4096]{0}', space=vmem, size = 0x1000, scoped, tag = 'output window, operand 0, single buffered']
    #allocation3 [shape = 's32[1]{0}', space=sflag, size = 0x4, scoped, tag = 'scoped memory for tpu_custom_call.1']
    %10 = vsyncpa [#allocation3], 0
    // Predicated region
    $region2: #{tpu_custom_call.1} parent=1 // pred_check
      _
    $region3: #{tpu_custom_call.1} parent=1 // pred_check_branch
      %12 = sbr.rel (0) target = $region5
    $region4: #{tpu_custom_call.1} parent=1 // pred_region
      _
    $region5: #{tpu_custom_call.1} parent=1 // pred_fallthru
      _
    // Predicated region
    $region6: #{tpu_custom_call.1} parent=1 // pred_check
      _
    $region7: #{tpu_custom_call.1} parent=1 // pred_check_branch
      %14 = sbr.rel (0) target = $region9
    $region8: #{tpu_custom_call.1} parent=1 // pred_region
      _
    $region9: #{tpu_custom_call.1} parent=1 // pred_fallthru
      _
    // Predicated region
    $region10: #{tpu_custom_call.1} parent=1 // pred_check
      _
    $region11: #{tpu_custom_call.1} parent=1 // pred_check_branch
      %16 = sbr.rel (0) target = $region13
    $region12: #{tpu_custom_call.1} parent=1 // pred_region
      _
    $region13: #{tpu_custom_call.1} parent=1 // pred_fallthru
      _
    // Predicated region
    $region14: #{tpu_custom_call.1} parent=1 // pred_check
      _
    $region15: #{tpu_custom_call.1} parent=1 // pred_check_branch
      %18 = sbr.rel (0) target = $region17
    $region16: #{tpu_custom_call.1} parent=1 // pred_region
      _
    $region17: #{tpu_custom_call.1} parent=1 // pred_fallthru
      _
    // Predicated region
    $region18: #{tpu_custom_call.1} parent=1 // pred_check
      _
    $region19: #{tpu_custom_call.1} parent=1 // pred_check_branch
      %20 = sbr.rel (0) target = $region21
    $region20: #{tpu_custom_call.1} parent=1 // pred_region
      _
    $region21: #{tpu_custom_call.1} parent=1 // pred_fallthru
      _
    %v21 = vld [vmem:[%s0] sm:$0xff]
    %v22 = vld [vmem:[%s1] sm:$0xff]
    %v23 = vld [vmem:[%s1 + $0x8] sm:$0xff]
    %v24 = vld [vmem:[%s1 + $0x10] sm:$0xff]
    %v25 = vld [vmem:[%s1 + $0x18] sm:$0xff]
    %v26 = vld [vmem:[%s2] sm:$0x1]
    %v28 = vperm.slane %v26, 0
    %vm30 = vcmask 261120
    %v32 = vsel %vm30, %v21, 0
    %34 = vmatpush.msra.mxu0 0.0
    %35 = vmatpush.msra.mxu0 0.0
    %36 = vmatpush.msra.mxu0 0.0
    %37 = vmatpush.msra.mxu0 0.0
    %38 = vmatpush.msra.mxu0 0.0
    %39 = vmatpush.msra.mxu0 0.0
    %40 = vmatpush.msra.mxu0 0.0
    %41 = vmatpush.msra.mxu0 0.0
    %42 = vmatpush.msra.mxu0 0.0
    %43 = vmatpush.msra.mxu0 0.0
    %44 = vmatpush.msra.mxu0 0.0
    %45 = vmatpush.msra.mxu0 0.0
    %46 = vmatpush.msra.mxu0 %v25
    %47 = vmatpush.msra.mxu0 %v24
    %48 = vmatpush.msra.mxu0 %v23
    %49 = vmatpush.msra.mxu0 %v22
    %50 = vmatmul.f32.gmra.mxu0 %v32
    %v51 = vpop.f32.mrf.mxu0
    %v52 = vadd.f32 %v28, %v51
    %53 = vdwg.mxu0
    %v54 = vmax.f32 %v52, 0.0
    %v55 = vld [vmem:[%s3] sm:$0xff]
    %v56 = vld [vmem:[%s3 + $0x8] sm:$0xff]
    %v57 = vld [vmem:[%s3 + $0x10] sm:$0xff]
    %v58 = vld [vmem:[%s3 + $0x18] sm:$0xff]
    %v59 = vld [vmem:[%s3 + $0x20] sm:$0xff]
    %v60 = vld [vmem:[%s3 + $0x28] sm:$0xff]
    %v61 = vld [vmem:[%s3 + $0x30] sm:$0xff]
    %v62 = vld [vmem:[%s3 + $0x38] sm:$0xff]
    %v63 = vld [vmem:[%s4] sm:$0x1]
    %v65 = vperm.slane %v63, 0
    %vm67 = vcmask 523264
    %v69 = vsel %vm67, %v54, 0
    %71 = vmatpush.msra.mxu0 0.0
    %72 = vmatpush.msra.mxu0 0.0
    %73 = vmatpush.msra.mxu0 0.0
    %74 = vmatpush.msra.mxu0 0.0
    %75 = vmatpush.msra.mxu0 0.0
    %76 = vmatpush.msra.mxu0 0.0
    %77 = vmatpush.msra.mxu0 0.0
    %78 = vmatpush.msra.mxu0 0.0
    %79 = vmatpush.msra.mxu0 %v62
    %80 = vmatpush.msra.mxu0 %v61
    %81 = vmatpush.msra.mxu0 %v60
    %82 = vmatpush.msra.mxu0 %v59
    %83 = vmatpush.msra.mxu0 %v58
    %84 = vmatpush.msra.mxu0 %v57
    %85 = vmatpush.msra.mxu0 %v56
    %86 = vmatpush.msra.mxu0 %v55
    %87 = vmatmul.f32.gmra.mxu0 %v69
    %v88 = vpop.f32.mrf.mxu0
    %v89 = vadd.f32 %v65, %v88
    %90 = vdwg.mxu0
    %vm91 = vcmask 130048
    %92 = vst.msk [vmem:[#allocation2] sm:$0xff] %vm91, %v89
    // Predicated region
    $region22: #{tpu_custom_call.1} parent=1 // pred_check
      _
    $region23: #{tpu_custom_call.1} parent=1 // pred_check_branch
      %94 = sbr.rel (0) target = $region25
    $region24: #{tpu_custom_call.1} parent=1 // pred_region
      %96 = vsyncadd [#allocation3], 0
      %s98 = sshll.u32 [#allocation2], 4
      %s99 = int_to_ptr.vmem [resolvable:$true] %s98
      %s100 = sshll.u32 %s5, 4
      %s101 = int_to_ptr.hbm [resolvable:$true] %s100
      %103 = dma.vmem_to_hbm [thread:$0]  %s99, 128, %s101, [#allocation3]
    $region25: #{tpu_custom_call.1} parent=1 // pred_fallthru
      _
    // Predicated region
    $region26: #{tpu_custom_call.1} parent=1 // pred_check
      _
    $region27: #{tpu_custom_call.1} parent=1 // pred_check_branch
      %105 = sbr.rel (0) target = $region29
    $region28: #{tpu_custom_call.1} parent=1 // pred_region
      %107 = dma.done [#allocation3], 128
    $region29: #{tpu_custom_call.1} parent=1 // pred_fallthru
      _
    %108 = vsyncpa [#allocation3], 1

</llo_original>
